<compile_context>
chip_gen: v7x
topology: tpu7x:2x2x1
jax: 0.10.0
libtpu: 0.0.40
codegen_flags: <defaults>
</compile_context>

<pallas_src>
import jax
import jax.numpy as jnp
from jax.experimental import pallas as pl
from jax.experimental.pallas import tpu as pltpu


# ----------------------------------------------------------------------------
# Helpers
# ----------------------------------------------------------------------------
def _round_up(x, m):
    return (x + m - 1) // m * m


def _pick_tile(total, max_tile, align):
    """Largest aligned divisor of `total` <= max_tile; full extent as fallback.

    K and Cout are padded to multiples of 128 by the caller, so the fallback
    (always a legal full-extent block) can only trigger for awkward spatial P.
    """
    if total <= max_tile:
        return total
    start = max_tile - (max_tile % align)
    for t in range(start, 0, -align):
        if total % t == 0:
            return t
    return total


# ----------------------------------------------------------------------------
# Kernels
# ----------------------------------------------------------------------------
def _conv_bn_stats_kernel(x_ref, w_ref, b_ref, o_ref, sum_ref, sq_ref):
    """Conv-as-matmul with fused BatchNorm partial statistics.

    x_ref  : (1, tp, tk)   bf16  im2col'ed activation tile
    w_ref  : (Kp, Cp)      bf16  full reshaped conv weight (resident in VMEM)
    b_ref  : (1, Cp)       f32   bias (channel-padded)
    o_ref  : (1, tp, Cp)   f32   conv output tile (resident across the K axis)
    sum_ref: (1, 1, 1, Cp) f32   per-tile partial sum       (written at finalize)
    sq_ref : (1, 1, 1, Cp) f32   per-tile partial sum of sq (written at finalize)
    """
    ki = pl.program_id(2)
    nk = pl.num_programs(2)
    tk = x_ref.shape[2]

    # No scratch accumulator: initialize the resident f32 output with the bias.
    @pl.when(ki == 0)
    def _():
        o_ref[0] = jnp.broadcast_to(b_ref[...], o_ref.shape[1:])

    k0 = pl.multiple_of(ki * tk, tk)
    o_ref[0] += jnp.dot(x_ref[0], w_ref[pl.ds(k0, tk), :],
                        preferred_element_type=jnp.float32)

    # Finalize: emit per-tile BN partials (VPU/XLU work, hidden under the MXU).
    @pl.when(ki == nk - 1)
    def _():
        y = o_ref[0]
        sum_ref[0, 0] = jnp.sum(y, axis=0, keepdims=True)
        sq_ref[0, 0] = jnp.sum(y * y, axis=0, keepdims=True)


def _bn_apply_kernel(x_ref, scale_ref, shift_ref, o_ref):
    """Apply the precomputed per-channel affine transform and drop channel padding.

    x_ref: (1, tr, Cp) f32;  scale/shift: (1, Cp) f32;  o_ref: (1, tr, Cout) f32
    """
    y = x_ref[0] * scale_ref[...] + shift_ref[...]
    o_ref[0] = y[:, : o_ref.shape[-1]].astype(o_ref.dtype)


# ----------------------------------------------------------------------------
# pallas_call wrappers
# ----------------------------------------------------------------------------
def _conv_bn_stats(xt, w2, b2):
    """xt: (N, P, Kp) bf16,  w2: (Kp, Cp) bf16,  b2: (1, Cp) f32.

    Returns (y, psum, psq):
      y    : (N, P, Cp)      f32  conv output (+bias)
      psum : (N, nP, 1, Cp)  f32  per-tile partial sums
      psq  : (N, nP, 1, Cp)  f32  per-tile partial sums of squares
    """
    N, P, Kp = xt.shape
    Cp = w2.shape[1]
    tp = _pick_tile(P, 512, 16)       # bf16 LHS: align sublane tile to 16
    tk = _pick_tile(Kp, 512, 128)
    nP, nK = P // tp, Kp // tk

    return pl.pallas_call(
        _conv_bn_stats_kernel,
        out_shape=(
            jax.ShapeDtypeStruct((N, P, Cp), jnp.float32),
            jax.ShapeDtypeStruct((N, nP, 1, Cp), jnp.float32),
            jax.ShapeDtypeStruct((N, nP, 1, Cp), jnp.float32),
        ),
        grid_spec=pltpu.PrefetchScalarGridSpec(
            num_scalar_prefetch=0,
            grid=(N, nP, nK),
            in_specs=[
                pl.BlockSpec((1, tp, tk), lambda n, pi, ki: (n, pi, ki)),
                # Full weight with a constant index_map -> DMA'd once, stays in VMEM.
                pl.BlockSpec((Kp, Cp), lambda n, pi, ki: (0, 0)),
                pl.BlockSpec((1, Cp), lambda n, pi, ki: (0, 0)),
            ],
            out_specs=(
                pl.BlockSpec((1, tp, Cp), lambda n, pi, ki: (n, pi, 0)),
                pl.BlockSpec((1, 1, 1, Cp), lambda n, pi, ki: (n, pi, 0, 0)),
                pl.BlockSpec((1, 1, 1, Cp), lambda n, pi, ki: (n, pi, 0, 0)),
            ),
        ),
        compiler_params=pltpu.CompilerParams(
            dimension_semantics=("parallel", "parallel", "arbitrary"),
            vmem_limit_bytes=48 * 1024 * 1024,
        ),
    )(xt, w2, b2)


def _bn_apply(y, scale, shift, cout):
    """y: (N, P, Cp) f32 -> (N, P, Cout) f32 normalized, channel padding dropped."""
    N, P, Cp = y.shape
    tr = _pick_tile(P, 1024, 8)
    return pl.pallas_call(
        _bn_apply_kernel,
        out_shape=jax.ShapeDtypeStruct((N, P, cout), jnp.float32),
        grid_spec=pltpu.PrefetchScalarGridSpec(
            num_scalar_prefetch=0,
            grid=(N, P // tr),
            in_specs=[
                pl.BlockSpec((1, tr, Cp), lambda n, pi: (n, pi, 0)),
                pl.BlockSpec((1, Cp), lambda n, pi: (0, 0)),
                pl.BlockSpec((1, Cp), lambda n, pi: (0, 0)),
            ],
            out_specs=pl.BlockSpec((1, tr, cout), lambda n, pi: (n, pi, 0)),
        ),
        compiler_params=pltpu.CompilerParams(
            dimension_semantics=("parallel", "parallel"),
            vmem_limit_bytes=32 * 1024 * 1024,
        ),
    )(y, scale, shift)


# ----------------------------------------------------------------------------
# RCBBlock forward (LeakyReLU(0.2) -> Conv2d 4x4/s2/p1 -> BatchNorm2d)
# ----------------------------------------------------------------------------
def rcb_block_forward(params, x_nchw, *, eps=1e-5, negative_slope=0.2):
    w, b = params["w"], params["b"]            # w: (Cout, Cin, 4, 4), torch layout
    gamma, beta = params["gamma"], params["beta"]
    Cout, Cin, KH, KW = w.shape
    N, C, H, W = x_nchw.shape
    assert C == Cin and H % 2 == 0 and W % 2 == 0
    Ho, Wo = H // 2, W // 2
    P = Ho * Wo
    K = KH * KW * Cin
    Kp = _round_up(K, 128)                     # lane-dense contraction axis
    Cp = _round_up(Cout, 128)                  # lane-dense output channels

    # NCHW -> NHWC; LeakyReLU applied exactly once (XLA fuses it into the slab build).
    x = jnp.transpose(x_nchw, (0, 2, 3, 1))
    x = jnp.where(x >= 0, x, negative_slope * x)

    # im2col with the 16 taps folded into the contraction axis (glue; XLA fuses
    # activation, padding, strided slicing and the bf16 cast into one fusion).
    xp = jnp.pad(x, ((0, 0), (1, 1), (1, 1), (0, 0)))
    taps = [xp[:, kh:kh + 2 * Ho:2, kw:kw + 2 * Wo:2, :]
            for kh in range(KH) for kw in range(KW)]
    xt = jnp.concatenate(taps, axis=-1).reshape(N, P, K)
    if Kp != K:
        xt = jnp.pad(xt, ((0, 0), (0, 0), (0, Kp - K)))
    xt = xt.astype(jnp.bfloat16)

    # Conv weight (Cout, Cin, KH, KW) -> (K, Cout), same tap order; zero-pad to (Kp, Cp).
    w2 = jnp.transpose(w, (2, 3, 1, 0)).reshape(K, Cout)
    w2 = jnp.pad(w2, ((0, Kp - K), (0, Cp - Cout))).astype(jnp.bfloat16)
    b2 = jnp.pad(b, (0, Cp - Cout)).reshape(1, Cp).astype(jnp.float32)

    # Fused conv + BN partial statistics.
    y, psum, psq = _conv_bn_stats(xt, w2, b2)

    # Reduce tiny per-tile partials and build the BN affine transform (O(Cp) JAX work).
    # Training-mode nn.BatchNorm2d: batch statistics with biased variance.
    count = float(N * P)
    s = jnp.sum(psum, axis=(0, 1, 2))
    q = jnp.sum(psq, axis=(0, 1, 2))
    mean = s / count
    var = jnp.maximum(q / count - mean * mean, 0.0)
    inv = jax.lax.rsqrt(var + eps)
    gamma_p = jnp.pad(gamma.astype(jnp.float32), (0, Cp - Cout))
    beta_p = jnp.pad(beta.astype(jnp.float32), (0, Cp - Cout))
    scale = (gamma_p * inv).reshape(1, Cp)
    shift = (beta_p - mean * gamma_p * inv).reshape(1, Cp)

    out = _bn_apply(y, scale, shift, Cout)                  # (N, P, Cout) f32
    return jnp.transpose(out.reshape(N, Ho, Wo, Cout), (0, 3, 1, 2))


# ----------------------------------------------------------------------------
# Parameters + pure-JAX reference
# ----------------------------------------------------------------------------
def init_rcb_params(key, in_channels, out_channels):
    k1, k2, k3, k4 = jax.random.split(key, 4)
    fan_in = in_channels * 4 * 4
    w = jax.random.normal(k1, (out_channels, in_channels, 4, 4), jnp.float32) \
        / jnp.sqrt(fan_in)
    b = 0.01 * jax.random.normal(k2, (out_channels,), jnp.float32)
    gamma = 1.0 + 0.1 * jax.random.normal(k3, (out_channels,), jnp.float32)
    beta = 0.1 * jax.random.normal(k4, (out_channels,), jnp.float32)
    return {"w": w, "b": b, "gamma": gamma, "beta": beta}


def rcb_block_ref(params, x_nchw, *, eps=1e-5, negative_slope=0.2, match_bf16=True):
    """Pure-JAX reference; match_bf16 casts matmul inputs to bf16 like the kernel."""
    w, b = params["w"], params["b"]
    gamma, beta = params["gamma"], params["beta"]
    x = jnp.transpose(x_nchw, (0, 2, 3, 1))
    x = jnp.where(x >= 0, x, negative_slope * x)
    w_hwio = jnp.transpose(w, (2, 3, 1, 0))
    lhs = x.astype(jnp.bfloat16) if match_bf16 else x
    rhs = w_hwio.astype(jnp.bfloat16) if match_bf16 else w_hwio
    y = jax.lax.conv_general_dilated(
        lhs, rhs, window_strides=(2, 2), padding=[(1, 1), (1, 1)],
        dimension_numbers=("NHWC", "HWIO", "NHWC"),
        preferred_element_type=jnp.float32)
    y = y + b.reshape(1, 1, 1, -1)
    mean = jnp.mean(y, axis=(0, 1, 2), keepdims=True)
    var = jnp.mean(jnp.square(y - mean), axis=(0, 1, 2), keepdims=True)
    y = (y - mean) * jax.lax.rsqrt(var + eps) * gamma.reshape(1, 1, 1, -1) \
        + beta.reshape(1, 1, 1, -1)
    return jnp.transpose(y, (0, 3, 1, 2))


# ----------------------------------------------------------------------------
if __name__ == "__main__":
    N, Cin, H, W = 2, 4, 16, 16
    Cout = 32

    key = jax.random.PRNGKey(0)
    kx, kp = jax.random.split(key)
    x = jax.random.normal(kx, (N, Cin, H, W), jnp.float32)   # NCHW, like PyTorch
    params = init_rcb_params(kp, Cin, Cout)

    fwd = jax.jit(rcb_block_forward)
    out = jax.block_until_ready(fwd(params, x))
    assert out.shape == (N, Cout, H // 2, W // 2), out.shape

    ref = rcb_block_ref(params, x)
    err = float(jnp.max(jnp.abs(out - ref)))
    assert err < 5e-3, f"max abs err {err}"

    print("KERNEL_OK")
</pallas_src>

<mosaic_0001>
module attributes {stable_mosaic.version = 11 : i64} {
  func.func @_conv_bn_stats_kernel(%arg0: i32, %arg1: i32, %arg2: i32, %arg3: memref<1x64x128xbf16, #tpu.memory_space<vmem>>, %arg4: memref<128x128xbf16, #tpu.memory_space<vmem>>, %arg5: memref<1x128xf32, #tpu.memory_space<vmem>>, %arg6: memref<1x64x128xf32, #tpu.memory_space<vmem>>, %arg7: memref<1x1x1x128xf32, #tpu.memory_space<vmem>>, %arg8: memref<1x1x1x128xf32, #tpu.memory_space<vmem>>) attributes {dimension_semantics = [#tpu.dimension_semantics<parallel>, #tpu.dimension_semantics<parallel>, #tpu.dimension_semantics<arbitrary>], iteration_bounds = array<i64: 2, 1, 1>, scalar_prefetch = 0 : i64, scratch_operands = 0 : i64, tpu.core_type = #tpu.core_type<tc>, window_params = [{transform_indices = @transform_0, window_bounds = array<i64: 1, 64, 128>}, {pipeline_mode = #tpu.pipeline_mode<synchronous>, transform_indices = @transform_1, window_bounds = array<i64: 128, 128>}, {pipeline_mode = #tpu.pipeline_mode<synchronous>, transform_indices = @transform_2, window_bounds = array<i64: 1, 128>}, {transform_indices = @transform_3, window_bounds = array<i64: 1, 64, 128>}, {transform_indices = @transform_4, window_bounds = array<i64: 1, 1, 1, 128>}, {transform_indices = @transform_5, window_bounds = array<i64: 1, 1, 1, 128>}]} {
    %c0_i32 = arith.constant 0 : i32
    %0 = arith.cmpi eq, %arg2, %c0_i32 : i32
    %1 = arith.extui %0 : i1 to i32
    %c0_i32_0 = arith.constant 0 : i32
    %2 = arith.cmpi ne, %1, %c0_i32_0 : i32
    scf.if %2 {
      %c0_12 = arith.constant 0 : index
      %c0_13 = arith.constant 0 : index
      %19 = vector.load %arg5[%c0_12, %c0_13] : memref<1x128xf32, #tpu.memory_space<vmem>>, vector<1x128xf32>
      %20 = vector.shape_cast %19 : vector<1x128xf32> to vector<1x128xf32>
      %21 = vector.broadcast %20 : vector<1x128xf32> to vector<64x128xf32>
      %c0_14 = arith.constant 0 : index
      %c0_15 = arith.constant 0 : index
      %c0_16 = arith.constant 0 : index
      %22 = vector.load %arg6[%c0_14, %c0_15, %c0_16] : memref<1x64x128xf32, #tpu.memory_space<vmem>>, vector<1x64x128xf32>
      %23 = vector.shape_cast %22 : vector<1x64x128xf32> to vector<64x128xf32>
      %24 = vector.shape_cast %21 : vector<64x128xf32> to vector<1x64x128xf32>
      tpu.vector_store %arg6[%c0_14, %c0_15, %c0_16], %24 {strides = array<i32>} : memref<1x64x128xf32, #tpu.memory_space<vmem>>, vector<1x64x128xf32>,
    } else {
    }
    %c128_i32 = arith.constant 128 : i32
    %3 = arith.muli %arg2, %c128_i32 : i32
    %4 = tpu.assume_multiple %3, 128 : i32
    %c0 = arith.constant 0 : index
    %c0_1 = arith.constant 0 : index
    %c0_2 = arith.constant 0 : index
    %5 = vector.load %arg6[%c0, %c0_1, %c0_2] : memref<1x64x128xf32, #tpu.memory_space<vmem>>, vector<1x64x128xf32>
    %6 = vector.shape_cast %5 : vector<1x64x128xf32> to vector<64x128xf32>
    %c0_3 = arith.constant 0 : index
    %c0_4 = arith.constant 0 : index
    %c0_5 = arith.constant 0 : index
    %7 = vector.load %arg3[%c0_3, %c0_4, %c0_5] : memref<1x64x128xbf16, #tpu.memory_space<vmem>>, vector<1x64x128xbf16>
    %8 = vector.shape_cast %7 : vector<1x64x128xbf16> to vector<64x128xbf16>
    %9 = arith.index_cast %4 : i32 to index
    %c0_6 = arith.constant 0 : index
    %10 = vector.load %arg4[%9, %c0_6] : memref<128x128xbf16, #tpu.memory_space<vmem>>, vector<128x128xbf16>
    %cst = arith.constant dense<0.000000e+00> : vector<64x128xf32>
    %11 = tpu.matmul %8, %10, %cst {dimension_numbers = #tpu.dot_dimension_numbers<[1], [0], [0], [1], [0, 0, 1, 1], [], []>} : vector<64x128xbf16>, vector<128x128xbf16>, vector<64x128xf32> -> vector<64x128xf32>
    %12 = arith.addf %6, %11 : vector<64x128xf32>
    %c0_7 = arith.constant 0 : index
    %c0_8 = arith.constant 0 : index
    %c0_9 = arith.constant 0 : index
    %13 = vector.load %arg6[%c0_7, %c0_8, %c0_9] : memref<1x64x128xf32, #tpu.memory_space<vmem>>, vector<1x64x128xf32>
    %14 = vector.shape_cast %13 : vector<1x64x128xf32> to vector<64x128xf32>
    %15 = vector.shape_cast %12 : vector<64x128xf32> to vector<1x64x128xf32>
    tpu.vector_store %arg6[%c0_7, %c0_8, %c0_9], %15 {strides = array<i32>} : memref<1x64x128xf32, #tpu.memory_space<vmem>>, vector<1x64x128xf32>,
    %c0_i32_10 = arith.constant 0 : i32
    %16 = arith.cmpi eq, %arg2, %c0_i32_10 : i32
    %17 = arith.extui %16 : i1 to i32
    %c0_i32_11 = arith.constant 0 : i32
    %18 = arith.cmpi ne, %17, %c0_i32_11 : i32
    scf.if %18 {
      %c0_12 = arith.constant 0 : index
      %c0_13 = arith.constant 0 : index
      %c0_14 = arith.constant 0 : index
      %19 = vector.load %arg6[%c0_12, %c0_13, %c0_14] : memref<1x64x128xf32, #tpu.memory_space<vmem>>, vector<1x64x128xf32>
      %20 = vector.shape_cast %19 : vector<1x64x128xf32> to vector<64x128xf32>
      %cst_15 = arith.constant dense<0.000000e+00> : vector<128xf32>
      %21 = vector.multi_reduction <add>, %20, %cst_15 [0] : vector<64x128xf32> to vector<128xf32>
      %22 = vector.shape_cast %21 : vector<128xf32> to vector<1x128xf32>
      %c0_16 = arith.constant 0 : index
      %c0_17 = arith.constant 0 : index
      %c0_18 = arith.constant 0 : index
      %c0_19 = arith.constant 0 : index
      %23 = vector.load %arg7[%c0_16, %c0_17, %c0_18, %c0_19] : memref<1x1x1x128xf32, #tpu.memory_space<vmem>>, vector<1x1x1x128xf32>
      %24 = vector.shape_cast %23 : vector<1x1x1x128xf32> to vector<1x128xf32>
      %25 = vector.shape_cast %22 : vector<1x128xf32> to vector<1x1x1x128xf32>
      tpu.vector_store %arg7[%c0_16, %c0_17, %c0_18, %c0_19], %25 {strides = array<i32>} : memref<1x1x1x128xf32, #tpu.memory_space<vmem>>, vector<1x1x1x128xf32>,
      %26 = arith.mulf %20, %20 : vector<64x128xf32>
      %cst_20 = arith.constant dense<0.000000e+00> : vector<128xf32>
      %27 = vector.multi_reduction <add>, %26, %cst_20 [0] : vector<64x128xf32> to vector<128xf32>
      %28 = vector.shape_cast %27 : vector<128xf32> to vector<1x128xf32>
      %c0_21 = arith.constant 0 : index
      %c0_22 = arith.constant 0 : index
      %c0_23 = arith.constant 0 : index
      %c0_24 = arith.constant 0 : index
      %29 = vector.load %arg8[%c0_21, %c0_22, %c0_23, %c0_24] : memref<1x1x1x128xf32, #tpu.memory_space<vmem>>, vector<1x1x1x128xf32>
      %30 = vector.shape_cast %29 : vector<1x1x1x128xf32> to vector<1x128xf32>
      %31 = vector.shape_cast %28 : vector<1x128xf32> to vector<1x1x1x128xf32>
      tpu.vector_store %arg8[%c0_21, %c0_22, %c0_23, %c0_24], %31 {strides = array<i32>} : memref<1x1x1x128xf32, #tpu.memory_space<vmem>>, vector<1x1x1x128xf32>,
    } else {
    }
    return
  }
  func.func @transform_0(%arg0: i32, %arg1: i32, %arg2: i32) -> (i32, i32, i32) {
    %c0_i32 = arith.constant 0 : i32
    return %arg0, %arg1, %arg2 : i32, i32, i32
  }
  func.func @transform_1(%arg0: i32, %arg1: i32, %arg2: i32) -> (i32, i32) {
    %c0_i32 = arith.constant 0 : i32
    %c0_i32_0 = arith.constant 0 : i32
    %c0_i32_1 = arith.constant 0 : i32
    return %c0_i32, %c0_i32_0 : i32, i32
  }
  func.func @transform_2(%arg0: i32, %arg1: i32, %arg2: i32) -> (i32, i32) {
    %c0_i32 = arith.constant 0 : i32
    %c0_i32_0 = arith.constant 0 : i32
    %c0_i32_1 = arith.constant 0 : i32
    return %c0_i32, %c0_i32_0 : i32, i32
  }
  func.func @transform_3(%arg0: i32, %arg1: i32, %arg2: i32) -> (i32, i32, i32) {
    %c0_i32 = arith.constant 0 : i32
    %c0_i32_0 = arith.constant 0 : i32
    return %arg0, %arg1, %c0_i32 : i32, i32, i32
  }
  func.func @transform_4(%arg0: i32, %arg1: i32, %arg2: i32) -> (i32, i32, i32, i32) {
    %c0_i32 = arith.constant 0 : i32
    %c0_i32_0 = arith.constant 0 : i32
    %c0_i32_1 = arith.constant 0 : i32
    return %arg0, %arg1, %c0_i32, %c0_i32_0 : i32, i32, i32, i32
  }
  func.func @transform_5(%arg0: i32, %arg1: i32, %arg2: i32) -> (i32, i32, i32, i32) {
    %c0_i32 = arith.constant 0 : i32
    %c0_i32_0 = arith.constant 0 : i32
    %c0_i32_1 = arith.constant 0 : i32
    return %arg0, %arg1, %c0_i32, %c0_i32_0 : i32, i32, i32, i32
  }
}

module attributes {stable_mosaic.version = 11 : i64} {
  func.func @_bn_apply_kernel(%arg0: i32, %arg1: i32, %arg2: memref<1x64x128xf32, #tpu.memory_space<vmem>>, %arg3: memref<1x128xf32, #tpu.memory_space<vmem>>, %arg4: memref<1x128xf32, #tpu.memory_space<vmem>>, %arg5: memref<1x64x32xf32, #tpu.memory_space<vmem>>) attributes {dimension_semantics = [#tpu.dimension_semantics<parallel>, #tpu.dimension_semantics<parallel>], iteration_bounds = array<i64: 2, 1>, scalar_prefetch = 0 : i64, scratch_operands = 0 : i64, tpu.core_type = #tpu.core_type<tc>, window_params = [{transform_indices = @transform_0, window_bounds = array<i64: 1, 64, 128>}, {pipeline_mode = #tpu.pipeline_mode<synchronous>, transform_indices = @transform_1, window_bounds = array<i64: 1, 128>}, {pipeline_mode = #tpu.pipeline_mode<synchronous>, transform_indices = @transform_2, window_bounds = array<i64: 1, 128>}, {transform_indices = @transform_3, window_bounds = array<i64: 1, 64, 32>}]} {
    %c0 = arith.constant 0 : index
    %c0_0 = arith.constant 0 : index
    %c0_1 = arith.constant 0 : index
    %0 = vector.load %arg2[%c0, %c0_0, %c0_1] : memref<1x64x128xf32, #tpu.memory_space<vmem>>, vector<1x64x128xf32>
    %1 = vector.shape_cast %0 : vector<1x64x128xf32> to vector<64x128xf32>
    %c0_2 = arith.constant 0 : index
    %c0_3 = arith.constant 0 : index
    %2 = vector.load %arg3[%c0_2, %c0_3] : memref<1x128xf32, #tpu.memory_space<vmem>>, vector<1x128xf32>
    %3 = vector.broadcast %2 : vector<1x128xf32> to vector<64x128xf32>
    %4 = arith.mulf %1, %3 : vector<64x128xf32>
    %c0_4 = arith.constant 0 : index
    %c0_5 = arith.constant 0 : index
    %5 = vector.load %arg4[%c0_4, %c0_5] : memref<1x128xf32, #tpu.memory_space<vmem>>, vector<1x128xf32>
    %6 = vector.broadcast %5 : vector<1x128xf32> to vector<64x128xf32>
    %7 = arith.addf %4, %6 : vector<64x128xf32>
    %8 = vector.extract_strided_slice %7 {offsets = [0, 0], sizes = [64, 32], strides = [1, 1]} : vector<64x128xf32> to vector<64x32xf32>
    %c0_6 = arith.constant 0 : index
    %c0_7 = arith.constant 0 : index
    %c0_8 = arith.constant 0 : index
    %9 = vector.load %arg5[%c0_6, %c0_7, %c0_8] : memref<1x64x32xf32, #tpu.memory_space<vmem>>, vector<1x64x32xf32>
    %10 = vector.shape_cast %9 : vector<1x64x32xf32> to vector<64x32xf32>
    %11 = vector.shape_cast %8 : vector<64x32xf32> to vector<1x64x32xf32>
    tpu.vector_store %arg5[%c0_6, %c0_7, %c0_8], %11 {strides = array<i32>} : memref<1x64x32xf32, #tpu.memory_space<vmem>>, vector<1x64x32xf32>,
    return
  }
  func.func @transform_0(%arg0: i32, %arg1: i32) -> (i32, i32, i32) {
    %c0_i32 = arith.constant 0 : i32
    %c0_i32_0 = arith.constant 0 : i32
    return %arg0, %arg1, %c0_i32 : i32, i32, i32
  }
  func.func @transform_1(%arg0: i32, %arg1: i32) -> (i32, i32) {
    %c0_i32 = arith.constant 0 : i32
    %c0_i32_0 = arith.constant 0 : i32
    %c0_i32_1 = arith.constant 0 : i32
    return %c0_i32, %c0_i32_0 : i32, i32
  }
  func.func @transform_2(%arg0: i32, %arg1: i32) -> (i32, i32) {
    %c0_i32 = arith.constant 0 : i32
    %c0_i32_0 = arith.constant 0 : i32
    %c0_i32_1 = arith.constant 0 : i32
    return %c0_i32, %c0_i32_0 : i32, i32
  }
  func.func @transform_3(%arg0: i32, %arg1: i32) -> (i32, i32, i32) {
    %c0_i32 = arith.constant 0 : i32
    %c0_i32_0 = arith.constant 0 : i32
    return %arg0, %arg1, %c0_i32 : i32, i32, i32
  }
}

</mosaic_0001>

<llo_original>
// kernel: rcb_block_forward.3
$region0: #{rcb_block_forward.3}
  #allocation0 [shape = 'u32[]', space=smem, size = 0x4, offset = 0x4, fixed_abs, tag = 'smem constant byte address 0x4 - core index']
  #allocation1 [shape = 'u32[144,128]{1,0:T(1,128)}', space=vmem, size = 0x12000, scoped, tag = 'internal scratch']
  %s0 = inlined_call_operand.vmem [shape: f32[2,64,128], index: 0, kind: input, shape index: {}]
  %s1 = inlined_call_operand.vmem [shape: f32[1,128], index: 1, kind: input, shape index: {}]
  %s2 = inlined_call_operand.vmem [shape: f32[1,128], index: 2, kind: input, shape index: {}]
  %s3 = inlined_call_operand.hbm [shape: f32[2,64,32], index: 3, kind: output, shape index: {}]
  %s4 = sld [smem:[#allocation0]]
  $region45: #{rcb_block_forward.3} parent=0
    _
  %s6 = ssub.s32 1, %s4
  %s7 = scalar_select 0, %s6, %s4
  $region1: #{rcb_block_forward.3} parent=0
    #allocation2 [shape = 'u8[65536]{0}', space=vmem, size = 0x10000, scoped, tag = 'output window, operand 0']
    #allocation3 [shape = 's32[2]{0}', space=sflag, size = 0x8, scoped, tag = 'scoped memory for rcb_block_forward.3']
    %8 = vsyncpa [#allocation3], 0
    %s9 = scalar_lea.sflag [#allocation3], 1
    %10 = vsyncpa %s9, 0
    loop: start=0, step=1, limit=4
    $region2: #{rcb_block_forward.3} parent=1 // loop_pre_header
      _
    $region3: #{rcb_block_forward.3} parent=1 // loop_header
      %s12 = sphi 0, %s16
      %p13 = scmp.ge.s32.totalorder %s12, 4
      %s19 = sphi 0, %s31
      %s20 = sphi 0, %s27
      %s21 = sphi 0, %s19
      %s22 = sphi 0, %s20
      %s23 = sphi 0, %s21
      %s24 = sphi 0, %s22
      %s36 = sphi 0, %s38
      %s39 = sphi 0, %s36
      %s40 = sphi 0, %s39
      %s56 = sphi 0, %s40
      %s60 = sphi 0, %s60
      %s62 = sphi 0, %s60
      %s63 = sphi 0, %s62
      %s77 = sphi 0, %s63
      %s81 = sphi 0, %s81
      %s83 = sphi 0, %s81
      %s84 = sphi 0, %s83
      %s98 = sphi 0, %s84
      %s106 = sphi 0, %s108
      %s109 = sphi 0, %s106
      %s110 = sphi 0, %s109
      %s126 = sphi 0, %s110
    $region4: #{rcb_block_forward.3} parent=1 // loop_header_branch
      %15 = sbr.rel (%p13) target = $region8
    $region5: #{rcb_block_forward.3} parent=1 // loop_body
      %s17 = ssub.s32 %s12, 1
      %s18 = ssub.s32 %s12, 2
      %s25 = sadd.s32 1, %s20
      %p26 = scmp.ge.s32.totalorder %s25, 1
      %s27 = scalar_select %p26, 0, %s25
      %s28 = sadd.s32 1, %s19
      %s29 = scalar_select %p26, %s28, %s19
      %p30 = scmp.ge.s32.totalorder %s29, 2
      %s31 = scalar_select %p30, 0, %s29
      %s32 = ssub.s32 %s19, %s31
      %s33 = ssub.s32 %s20, %s27
      %s34 = sor.u32 %s32, %s33
      %p35 = scmp.eq.s32.totalorder %s34, 0
      %s37 = sadd.s32 %s36, 1
      %s38 = scalar_select %p35, %s36, %s37
      %p41 = pneg %p35
      %p42 = scmp.eq.s32.totalorder %s12, 1
      %p43 = por %p41, %p42
      %p44 = scmp.ne.s32.totalorder %s36, %s39
      %p45 = scmp.eq.s32.totalorder %s12, 0
      %p46 = por %p44, %p45
      %p47 = scmp.ne.s32.totalorder %s36, %s39
      %p48 = scmp.eq.s32.totalorder %s17, 1
      %p49 = por %p47, %p48
      %p50 = scmp.ne.s32.totalorder %s39, %s40
      %p51 = scmp.eq.s32.totalorder %s17, 0
      %p52 = por %p50, %p51
      %p53 = scmp.ne.s32.totalorder %s39, %s40
      %p54 = scmp.eq.s32.totalorder %s18, 1
      %p55 = por %p53, %p54
      %p57 = scmp.ne.s32.totalorder %s40, %s56
      %p58 = scmp.eq.s32.totalorder %s18, 0
      %p59 = por %p57, %p58
      %s61 = sadd.s32 %s60, 1
      %p64 = scmp.eq.s32.totalorder %s12, 1
      %p65 = scmp.ne.s32.totalorder %s60, %s62
      %p66 = scmp.eq.s32.totalorder %s12, 0
      %p67 = por %p65, %p66
      %p68 = scmp.ne.s32.totalorder %s60, %s62
      %p69 = scmp.eq.s32.totalorder %s17, 1
      %p70 = por %p68, %p69
      %p71 = scmp.ne.s32.totalorder %s62, %s63
      %p72 = scmp.eq.s32.totalorder %s17, 0
      %p73 = por %p71, %p72
      %p74 = scmp.ne.s32.totalorder %s62, %s63
      %p75 = scmp.eq.s32.totalorder %s18, 1
      %p76 = por %p74, %p75
      %p78 = scmp.ne.s32.totalorder %s63, %s77
      %p79 = scmp.eq.s32.totalorder %s18, 0
      %p80 = por %p78, %p79
      %s82 = sadd.s32 %s81, 1
      %p85 = scmp.eq.s32.totalorder %s12, 1
      %p86 = scmp.ne.s32.totalorder %s81, %s83
      %p87 = scmp.eq.s32.totalorder %s12, 0
      %p88 = por %p86, %p87
      %p89 = scmp.ne.s32.totalorder %s81, %s83
      %p90 = scmp.eq.s32.totalorder %s17, 1
      %p91 = por %p89, %p90
      %p92 = scmp.ne.s32.totalorder %s83, %s84
      %p93 = scmp.eq.s32.totalorder %s17, 0
      %p94 = por %p92, %p93
      %p95 = scmp.ne.s32.totalorder %s83, %s84
      %p96 = scmp.eq.s32.totalorder %s18, 1
      %p97 = por %p95, %p96
      %p99 = scmp.ne.s32.totalorder %s84, %s98
      %p100 = scmp.eq.s32.totalorder %s18, 0
      %p101 = por %p99, %p100
      %s102 = ssub.s32 %s19, %s31
      %s103 = ssub.s32 %s20, %s27
      %s104 = sor.u32 %s102, %s103
      %p105 = scmp.eq.s32.totalorder %s104, 0
      %s107 = sadd.s32 %s106, 1
      %s108 = scalar_select %p105, %s106, %s107
      %p111 = pneg %p105
      %p112 = scmp.eq.s32.totalorder %s12, 1
      %p113 = por %p111, %p112
      %p114 = scmp.ne.s32.totalorder %s106, %s109
      %p115 = scmp.eq.s32.totalorder %s12, 0
      %p116 = por %p114, %p115
      %p117 = scmp.ne.s32.totalorder %s106, %s109
      %p118 = scmp.eq.s32.totalorder %s17, 1
      %p119 = por %p117, %p118
      %p120 = scmp.ne.s32.totalorder %s109, %s110
      %p121 = scmp.eq.s32.totalorder %s17, 0
      %p122 = por %p120, %p121
      %p123 = scmp.ne.s32.totalorder %s109, %s110
      %p124 = scmp.eq.s32.totalorder %s18, 1
      %p125 = por %p123, %p124
      %p127 = scmp.ne.s32.totalorder %s110, %s126
      %p128 = scmp.eq.s32.totalorder %s18, 0
      %p129 = por %p127, %p128
      %p130 = scmp.le.s32.totalorder 1, %s12
      %p131 = scmp.lt.s32.totalorder %s12, 3
      %p132 = pnand %p130, %p131
      %p133 = pneg %p132
      // Predicated region
      $region9: #{rcb_block_forward.3} parent=5 // pred_check
        _
      $region10: #{rcb_block_forward.3} parent=5 // pred_check_branch
        %135 = sbr.rel (%p132) target = $region12
      $region11: #{rcb_block_forward.3} parent=5 // pred_region
        %s136 = ssub.s32 %s12, 1
        // Predicated region
        $region13: #{rcb_block_forward.3} parent=11 // pred_check
          %p137 = pneg %p73
        $region14: #{rcb_block_forward.3} parent=11 // pred_check_branch
          %139 = sbr.rel (%p137) target = $region16
        $region15: #{rcb_block_forward.3} parent=11 // pred_region
          _
        $region16: #{rcb_block_forward.3} parent=11 // pred_fallthru
          _
        // Predicated region
        $region17: #{rcb_block_forward.3} parent=11 // pred_check
          %p140 = pneg %p94
        $region18: #{rcb_block_forward.3} parent=11 // pred_check_branch
          %142 = sbr.rel (%p140) target = $region20
        $region19: #{rcb_block_forward.3} parent=11 // pred_region
          _
        $region20: #{rcb_block_forward.3} parent=11 // pred_fallthru
          _
      $region12: #{rcb_block_forward.3} parent=5 // pred_fallthru
        _
      %p143 = scmp.lt.s32.totalorder %s12, 2
      // Predicated region
      $region21: #{rcb_block_forward.3} parent=5 // pred_check
        %p144 = pneg %p143
      $region22: #{rcb_block_forward.3} parent=5 // pred_check_branch
        %146 = sbr.rel (%p144) target = $region24
      $region23: #{rcb_block_forward.3} parent=5 // pred_region
        // Predicated region
        $region25: #{rcb_block_forward.3} parent=23 // pred_check
          %p147 = pneg %p46
        $region26: #{rcb_block_forward.3} parent=23 // pred_check_branch
          %149 = sbr.rel (%p147) target = $region28
        $region27: #{rcb_block_forward.3} parent=23 // pred_region
          %s150 = smul.u32 8, %s20
          %p151 = scmp.lt.s32.totalorder %s19, 1
          %s152 = scalar_select %p151, %s19, 1
          %p153 = scmp.lt.s32.totalorder %s150, 7
          %s154 = scalar_select %p153, %s150, 7
          %s155 = smul.addr %s152, 8
          %s156 = sadd.s32 %s154, %s155
          %s157 = smul.addr %s156, 8
          %s158 = scalar_lea.vmem %s0, %s157
          %s159 = smul.u32 8, %s20
        $region28: #{rcb_block_forward.3} parent=23 // pred_fallthru
          _
      $region24: #{rcb_block_forward.3} parent=5 // pred_fallthru
        _
      %p160 = scmp.le.s32.totalorder 1, %s12
      %p161 = scmp.lt.s32.totalorder %s12, 3
      %p162 = pnand %p160, %p161
      %p163 = pneg %p162
      // Predicated region
      $region29: #{rcb_block_forward.3} parent=5 // pred_check
        _
      $region30: #{rcb_block_forward.3} parent=5 // pred_check_branch
        %165 = sbr.rel (%p162) target = $region32
      $region31: #{rcb_block_forward.3} parent=5 // pred_region
        %s166 = ssub.s32 %s12, 1
        %s167 = smul.u32 8, %s22
        %p168 = scmp.lt.s32.totalorder %s21, 1
        %s169 = scalar_select %p168, %s21, 1
        %p170 = scmp.lt.s32.totalorder %s167, 7
        %s171 = scalar_select %p170, %s167, 7
        %s172 = smul.addr %s169, 8
        %s173 = sadd.s32 %s171, %s172
        %s174 = smul.addr %s173, 8
        %s175 = scalar_lea.vmem %s0, %s174
        %p176 = pneg %p52
        %p177 = pneg %p49
        %p178 = pneg %p73
        %p179 = pneg %p70
        %p180 = pneg %p94
        %p181 = pneg %p91
        %p182 = pneg %p122
        %p183 = pneg %p119
        %s184 = sand.u32 %s109, 1
        %s185 = scalar_lea.sflag [#allocation3], %s184
        %s186 = sand.u32 %s109, 1
        %s187 = smul.addr %s186, 64
        %s188 = scalar_lea.vmem [#allocation2], %s187
        %s189 = smul.u32 8, %s22
        %p190 = scmp.lt.s32.totalorder %s21, 1
        %s191 = scalar_select %p190, %s21, 1
        %p192 = scmp.lt.s32.totalorder %s189, 7
        %s193 = scalar_select %p192, %s189, 7
        %s194 = smul.addr %s191, 8
        %s195 = sadd.s32 %s193, %s194
        %s196 = smul.addr %s195, 8
        %s197 = scalar_lea.vmem %s0, %s196
        %s198 = smul.u32 8, %s22
        %s199 = smul.u32 8, %s22
        %v200 = vld [vmem:[%s197] sm:$0xff]
        %v201 = vld [vmem:[%s197 + $0x8] sm:$0xff]
        %v202 = vld [vmem:[%s197 + $0x10] sm:$0xff]
        %v203 = vld [vmem:[%s197 + $0x18] sm:$0xff]
        %v204 = vld [vmem:[%s197 + $0x20] sm:$0xff]
        %v205 = vld [vmem:[%s197 + $0x28] sm:$0xff]
        %v206 = vld [vmem:[%s197 + $0x30] sm:$0xff]
        %v207 = vld [vmem:[%s197 + $0x38] sm:$0xff]
        %v208 = vld [vmem:[%s1] sm:$0x1]
        %v210 = vlaneseq
        %v211 = vshrl.u32 %v210, 7
        %v212 = vsub.s32 0, %v211
        %v213 = vrot.slane %v208, %v212
        %v215 = vmul.f32 %v200, %v213
        %v216 = vmul.f32 %v201, %v213
        %v217 = vmul.f32 %v202, %v213
        %v218 = vmul.f32 %v203, %v213
        %v219 = vmul.f32 %v204, %v213
        %v220 = vmul.f32 %v205, %v213
        %v221 = vmul.f32 %v206, %v213
        %v222 = vmul.f32 %v207, %v213
        %v223 = vld [vmem:[%s2] sm:$0x1]
        %v225 = vlaneseq
        %v226 = vshrl.u32 %v225, 7
        %v227 = vsub.s32 0, %v226
        %v228 = vrot.slane %v223, %v227
        %v230 = vadd.f32 %v215, %v228
        %v231 = vadd.f32 %v216, %v228
        %v232 = vadd.f32 %v217, %v228
        %v233 = vadd.f32 %v218, %v228
        %v234 = vadd.f32 %v219, %v228
        %v235 = vadd.f32 %v220, %v228
        %v236 = vadd.f32 %v221, %v228
        %v237 = vadd.f32 %v222, %v228
        %vm238 = vcmask 261120
        %239 = vst.msk [vmem:[%s188] sm:$0xff] %vm238, %v230
        %240 = vst.msk [vmem:[%s188 + $0x8] sm:$0xff] %vm238, %v231
        %241 = vst.msk [vmem:[%s188 + $0x10] sm:$0xff] %vm238, %v232
        %242 = vst.msk [vmem:[%s188 + $0x18] sm:$0xff] %vm238, %v233
        %243 = vst.msk [vmem:[%s188 + $0x20] sm:$0xff] %vm238, %v234
        %244 = vst.msk [vmem:[%s188 + $0x28] sm:$0xff] %vm238, %v235
        %245 = vst.msk [vmem:[%s188 + $0x30] sm:$0xff] %vm238, %v236
        %246 = vst.msk [vmem:[%s188 + $0x38] sm:$0xff] %vm238, %v237
        %s247 = sand.u32 %s109, 1
        %s248 = scalar_lea.sflag [#allocation3], %s247
        %s249 = sand.u32 %s109, 1
        %s250 = smul.addr %s249, 64
        %s251 = scalar_lea.vmem [#allocation2], %s250
        // Predicated region
        $region33: #{rcb_block_forward.3} parent=31 // pred_check
          %p252 = pneg %p119
        $region34: #{rcb_block_forward.3} parent=31 // pred_check_branch
          %254 = sbr.rel (%p252) target = $region36
        $region35: #{rcb_block_forward.3} parent=31 // pred_region
          %s255 = smul.u32 8, %s22
          %s257 = ssub.s32 1024, 1024
          %258 = vsyncadd %s248, %s257
          %s259 = smul.addr %s21, 8
          %s260 = sadd.s32 %s255, %s259
          %s261 = smul.addr %s260, 128
          %s262 = scalar_lea.hbm %s3, %s261
          %s263 = sshll.u32 %s251, 4
          %s264 = int_to_ptr.vmem [resolvable:$true] %s263
          %269 = dma.vmem_to_hbm [thread:$0]  %s264, 1024, %s262, %s248, 128, 128, 8
        $region36: #{rcb_block_forward.3} parent=31 // pred_fallthru
          _
      $region32: #{rcb_block_forward.3} parent=5 // pred_fallthru
        _
      %p270 = scmp.le.s32.totalorder 2, %s12
      // Predicated region
      $region37: #{rcb_block_forward.3} parent=5 // pred_check
        %p271 = pneg %p270
      $region38: #{rcb_block_forward.3} parent=5 // pred_check_branch
        %273 = sbr.rel (%p271) target = $region40
      $region39: #{rcb_block_forward.3} parent=5 // pred_region
        %s274 = ssub.s32 %s12, 2
        // Predicated region
        $region41: #{rcb_block_forward.3} parent=39 // pred_check
          %p275 = pneg %p125
        $region42: #{rcb_block_forward.3} parent=39 // pred_check_branch
          %277 = sbr.rel (%p275) target = $region44
        $region43: #{rcb_block_forward.3} parent=39 // pred_region
          %s278 = sand.u32 %s110, 1
          %s279 = scalar_lea.sflag [#allocation3], %s278
          %s280 = sand.u32 %s110, 1
          %s281 = smul.addr %s280, 64
          %s282 = scalar_lea.vmem [#allocation2], %s281
          %283 = dma.done %s279, 1024
        $region44: #{rcb_block_forward.3} parent=39 // pred_fallthru
          _
      $region40: #{rcb_block_forward.3} parent=5 // pred_fallthru
        _
    $region6: #{rcb_block_forward.3} parent=1 // loop_footer
      %s16 = sadd.s32 1, %s12
    $region7: #{rcb_block_forward.3} parent=1 // loop_footer_branch
      %11 = sbr.rel target = $region3
    $region8: #{rcb_block_forward.3} parent=1 // loop_exit
      _
    %284 = vsyncpa [#allocation3], 1
    %s285 = scalar_lea.sflag [#allocation3], 1
    %286 = vsyncpa %s285, 1

// kernel: rcb_block_forward.2
$region0: #{rcb_block_forward.2}
  #allocation0 [shape = 'u32[]', space=smem, size = 0x4, offset = 0x4, fixed_abs, tag = 'smem constant byte address 0x4 - core index']
  #allocation1 [shape = 'u32[144,128]{1,0:T(1,128)}', space=vmem, size = 0x12000, scoped, tag = 'internal scratch']
  %s0 = inlined_call_operand.vmem [shape: bf16[2,64,128], index: 0, kind: input, shape index: {}]
  %s1 = inlined_call_operand.vmem [shape: bf16[128,128], index: 1, kind: input, shape index: {}]
  %s2 = inlined_call_operand.vmem [shape: f32[1,128], index: 2, kind: input, shape index: {}]
  %s3 = inlined_call_operand.vmem [shape: f32[2,64,128], index: 3, kind: output, shape index: {0}]
  %s4 = inlined_call_operand.vmem [shape: f32[2,1,1,128], index: 4, kind: output, shape index: {1}]
  %s5 = inlined_call_operand.vmem [shape: f32[2,1,1,128], index: 5, kind: output, shape index: {2}]
  %6 = xla_tuple %s3, %s4, %s5
  %s7 = sld [smem:[#allocation0]]
  $region69: #{rcb_block_forward.2} parent=0
    _
  %s9 = ssub.s32 1, %s7
  %s10 = scalar_select 0, %s9, %s7
  loop: start=0, step=1, limit=4
  $region2: #{rcb_block_forward.2} parent=0 // loop_pre_header
    _
  $region3: #{rcb_block_forward.2} parent=0 // loop_header
    %s12 = sphi 0, %s16
    %p13 = scmp.ge.s32.totalorder %s12, 4
    %s19 = sphi 0, %s38
    %s20 = sphi 0, %s34
    %s21 = sphi 0, %s30
    %s22 = sphi 0, %s19
    %s23 = sphi 0, %s20
    %s24 = sphi 0, %s21
    %s25 = sphi 0, %s22
    %s26 = sphi 0, %s23
    %s27 = sphi 0, %s24
    %s45 = sphi 0, %s47
    %s48 = sphi 0, %s45
    %s49 = sphi 0, %s48
    %s65 = sphi 0, %s49
    %s69 = sphi 0, %s69
    %s71 = sphi 0, %s69
    %s72 = sphi 0, %s71
    %s86 = sphi 0, %s72
    %s90 = sphi 0, %s90
    %s92 = sphi 0, %s90
    %s93 = sphi 0, %s92
    %s107 = sphi 0, %s93
    %s115 = sphi 0, %s117
    %s118 = sphi 0, %s115
    %s119 = sphi 0, %s118
    %s135 = sphi 0, %s119
    %s143 = sphi 0, %s145
    %s146 = sphi 0, %s143
    %s147 = sphi 0, %s146
    %s163 = sphi 0, %s147
    %s171 = sphi 0, %s173
    %s174 = sphi 0, %s171
    %s175 = sphi 0, %s174
    %s191 = sphi 0, %s175
  $region4: #{rcb_block_forward.2} parent=0 // loop_header_branch
    %15 = sbr.rel (%p13) target = $region8
  $region5: #{rcb_block_forward.2} parent=0 // loop_body
    %s17 = ssub.s32 %s12, 1
    %s18 = ssub.s32 %s12, 2
    %s28 = sadd.s32 1, %s21
    %p29 = scmp.ge.s32.totalorder %s28, 1
    %s30 = scalar_select %p29, 0, %s28
    %s31 = sadd.s32 1, %s20
    %s32 = scalar_select %p29, %s31, %s20
    %p33 = scmp.ge.s32.totalorder %s32, 1
    %s34 = scalar_select %p33, 0, %s32
    %s35 = sadd.s32 1, %s19
    %s36 = scalar_select %p33, %s35, %s19
    %p37 = scmp.ge.s32.totalorder %s36, 2
    %s38 = scalar_select %p37, 0, %s36
    %s39 = ssub.s32 %s19, %s38
    %s40 = ssub.s32 %s20, %s34
    %s41 = sor.u32 %s39, %s40
    %s42 = ssub.s32 %s21, %s30
    %s43 = sor.u32 %s41, %s42
    %p44 = scmp.eq.s32.totalorder %s43, 0
    %s46 = sadd.s32 %s45, 1
    %s47 = scalar_select %p44, %s45, %s46
    %p50 = pneg %p44
    %p51 = scmp.eq.s32.totalorder %s12, 1
    %p52 = por %p50, %p51
    %p53 = scmp.ne.s32.totalorder %s45, %s48
    %p54 = scmp.eq.s32.totalorder %s12, 0
    %p55 = por %p53, %p54
    %p56 = scmp.ne.s32.totalorder %s45, %s48
    %p57 = scmp.eq.s32.totalorder %s17, 1
    %p58 = por %p56, %p57
    %p59 = scmp.ne.s32.totalorder %s48, %s49
    %p60 = scmp.eq.s32.totalorder %s17, 0
    %p61 = por %p59, %p60
    %p62 = scmp.ne.s32.totalorder %s48, %s49
    %p63 = scmp.eq.s32.totalorder %s18, 1
    %p64 = por %p62, %p63
    %p66 = scmp.ne.s32.totalorder %s49, %s65
    %p67 = scmp.eq.s32.totalorder %s18, 0
    %p68 = por %p66, %p67
    %s70 = sadd.s32 %s69, 1
    %p73 = scmp.eq.s32.totalorder %s12, 1
    %p74 = scmp.ne.s32.totalorder %s69, %s71
    %p75 = scmp.eq.s32.totalorder %s12, 0
    %p76 = por %p74, %p75
    %p77 = scmp.ne.s32.totalorder %s69, %s71
    %p78 = scmp.eq.s32.totalorder %s17, 1
    %p79 = por %p77, %p78
    %p80 = scmp.ne.s32.totalorder %s71, %s72
    %p81 = scmp.eq.s32.totalorder %s17, 0
    %p82 = por %p80, %p81
    %p83 = scmp.ne.s32.totalorder %s71, %s72
    %p84 = scmp.eq.s32.totalorder %s18, 1
    %p85 = por %p83, %p84
    %p87 = scmp.ne.s32.totalorder %s72, %s86
    %p88 = scmp.eq.s32.totalorder %s18, 0
    %p89 = por %p87, %p88
    %s91 = sadd.s32 %s90, 1
    %p94 = scmp.eq.s32.totalorder %s12, 1
    %p95 = scmp.ne.s32.totalorder %s90, %s92
    %p96 = scmp.eq.s32.totalorder %s12, 0
    %p97 = por %p95, %p96
    %p98 = scmp.ne.s32.totalorder %s90, %s92
    %p99 = scmp.eq.s32.totalorder %s17, 1
    %p100 = por %p98, %p99
    %p101 = scmp.ne.s32.totalorder %s92, %s93
    %p102 = scmp.eq.s32.totalorder %s17, 0
    %p103 = por %p101, %p102
    %p104 = scmp.ne.s32.totalorder %s92, %s93
    %p105 = scmp.eq.s32.totalorder %s18, 1
    %p106 = por %p104, %p105
    %p108 = scmp.ne.s32.totalorder %s93, %s107
    %p109 = scmp.eq.s32.totalorder %s18, 0
    %p110 = por %p108, %p109
    %s111 = ssub.s32 %s19, %s38
    %s112 = ssub.s32 %s20, %s34
    %s113 = sor.u32 %s111, %s112
    %p114 = scmp.eq.s32.totalorder %s113, 0
    %s116 = sadd.s32 %s115, 1
    %s117 = scalar_select %p114, %s115, %s116
    %p120 = pneg %p114
    %p121 = scmp.eq.s32.totalorder %s12, 1
    %p122 = por %p120, %p121
    %p123 = scmp.ne.s32.totalorder %s115, %s118
    %p124 = scmp.eq.s32.totalorder %s12, 0
    %p125 = por %p123, %p124
    %p126 = scmp.ne.s32.totalorder %s115, %s118
    %p127 = scmp.eq.s32.totalorder %s17, 1
    %p128 = por %p126, %p127
    %p129 = scmp.ne.s32.totalorder %s118, %s119
    %p130 = scmp.eq.s32.totalorder %s17, 0
    %p131 = por %p129, %p130
    %p132 = scmp.ne.s32.totalorder %s118, %s119
    %p133 = scmp.eq.s32.totalorder %s18, 1
    %p134 = por %p132, %p133
    %p136 = scmp.ne.s32.totalorder %s119, %s135
    %p137 = scmp.eq.s32.totalorder %s18, 0
    %p138 = por %p136, %p137
    %s139 = ssub.s32 %s19, %s38
    %s140 = ssub.s32 %s20, %s34
    %s141 = sor.u32 %s139, %s140
    %p142 = scmp.eq.s32.totalorder %s141, 0
    %s144 = sadd.s32 %s143, 1
    %s145 = scalar_select %p142, %s143, %s144
    %p148 = pneg %p142
    %p149 = scmp.eq.s32.totalorder %s12, 1
    %p150 = por %p148, %p149
    %p151 = scmp.ne.s32.totalorder %s143, %s146
    %p152 = scmp.eq.s32.totalorder %s12, 0
    %p153 = por %p151, %p152
    %p154 = scmp.ne.s32.totalorder %s143, %s146
    %p155 = scmp.eq.s32.totalorder %s17, 1
    %p156 = por %p154, %p155
    %p157 = scmp.ne.s32.totalorder %s146, %s147
    %p158 = scmp.eq.s32.totalorder %s17, 0
    %p159 = por %p157, %p158
    %p160 = scmp.ne.s32.totalorder %s146, %s147
    %p161 = scmp.eq.s32.totalorder %s18, 1
    %p162 = por %p160, %p161
    %p164 = scmp.ne.s32.totalorder %s147, %s163
    %p165 = scmp.eq.s32.totalorder %s18, 0
    %p166 = por %p164, %p165
    %s167 = ssub.s32 %s19, %s38
    %s168 = ssub.s32 %s20, %s34
    %s169 = sor.u32 %s167, %s168
    %p170 = scmp.eq.s32.totalorder %s169, 0
    %s172 = sadd.s32 %s171, 1
    %s173 = scalar_select %p170, %s171, %s172
    %p176 = pneg %p170
    %p177 = scmp.eq.s32.totalorder %s12, 1
    %p178 = por %p176, %p177
    %p179 = scmp.ne.s32.totalorder %s171, %s174
    %p180 = scmp.eq.s32.totalorder %s12, 0
    %p181 = por %p179, %p180
    %p182 = scmp.ne.s32.totalorder %s171, %s174
    %p183 = scmp.eq.s32.totalorder %s17, 1
    %p184 = por %p182, %p183
    %p185 = scmp.ne.s32.totalorder %s174, %s175
    %p186 = scmp.eq.s32.totalorder %s17, 0
    %p187 = por %p185, %p186
    %p188 = scmp.ne.s32.totalorder %s174, %s175
    %p189 = scmp.eq.s32.totalorder %s18, 1
    %p190 = por %p188, %p189
    %p192 = scmp.ne.s32.totalorder %s175, %s191
    %p193 = scmp.eq.s32.totalorder %s18, 0
    %p194 = por %p192, %p193
    %p195 = scmp.le.s32.totalorder 1, %s12
    %p196 = scmp.lt.s32.totalorder %s12, 3
    %p197 = pnand %p195, %p196
    %p198 = pneg %p197
    // Predicated region
    $region9: #{rcb_block_forward.2} parent=5 // pred_check
      _
    $region10: #{rcb_block_forward.2} parent=5 // pred_check_branch
      %200 = sbr.rel (%p197) target = $region12
    $region11: #{rcb_block_forward.2} parent=5 // pred_region
      %s201 = ssub.s32 %s12, 1
      // Predicated region
      $region13: #{rcb_block_forward.2} parent=11 // pred_check
        %p202 = pneg %p82
      $region14: #{rcb_block_forward.2} parent=11 // pred_check_branch
        %204 = sbr.rel (%p202) target = $region16
      $region15: #{rcb_block_forward.2} parent=11 // pred_region
        _
      $region16: #{rcb_block_forward.2} parent=11 // pred_fallthru
        _
      // Predicated region
      $region17: #{rcb_block_forward.2} parent=11 // pred_check
        %p205 = pneg %p103
      $region18: #{rcb_block_forward.2} parent=11 // pred_check_branch
        %207 = sbr.rel (%p205) target = $region20
      $region19: #{rcb_block_forward.2} parent=11 // pred_region
        _
      $region20: #{rcb_block_forward.2} parent=11 // pred_fallthru
        _
    $region12: #{rcb_block_forward.2} parent=5 // pred_fallthru
      _
    %p208 = scmp.lt.s32.totalorder %s12, 2
    // Predicated region
    $region21: #{rcb_block_forward.2} parent=5 // pred_check
      %p209 = pneg %p208
    $region22: #{rcb_block_forward.2} parent=5 // pred_check_branch
      %211 = sbr.rel (%p209) target = $region24
    $region23: #{rcb_block_forward.2} parent=5 // pred_region
      // Predicated region
      $region25: #{rcb_block_forward.2} parent=23 // pred_check
        %p212 = pneg %p55
      $region26: #{rcb_block_forward.2} parent=23 // pred_check_branch
        %214 = sbr.rel (%p212) target = $region28
      $region27: #{rcb_block_forward.2} parent=23 // pred_region
        %s215 = smul.u32 8, %s20
        %p216 = scmp.lt.s32.totalorder %s19, 1
        %s217 = scalar_select %p216, %s19, 1
        %p218 = scmp.lt.s32.totalorder %s215, 7
        %s219 = scalar_select %p218, %s215, 7
        %p220 = scmp.lt.s32.totalorder %s21, 0
        %s221 = scalar_select %p220, %s21, 0
        %s222 = sadd.s32 %s221, %s219
        %s223 = smul.addr %s217, 8
        %s224 = sadd.s32 %s222, %s223
        %s225 = smul.addr %s224, 4
        %s226 = scalar_lea.vmem %s0, %s225
        %s227 = smul.u32 8, %s20
      $region28: #{rcb_block_forward.2} parent=23 // pred_fallthru
        _
    $region24: #{rcb_block_forward.2} parent=5 // pred_fallthru
      _
    %p228 = scmp.le.s32.totalorder 1, %s12
    %p229 = scmp.lt.s32.totalorder %s12, 3
    %p230 = pnand %p228, %p229
    %p231 = pneg %p230
    // Predicated region
    $region29: #{rcb_block_forward.2} parent=5 // pred_check
      _
    $region30: #{rcb_block_forward.2} parent=5 // pred_check_branch
      %233 = sbr.rel (%p230) target = $region32
    $region31: #{rcb_block_forward.2} parent=5 // pred_region
      %s234 = ssub.s32 %s12, 1
      %s235 = smul.u32 8, %s23
      %p236 = scmp.lt.s32.totalorder %s22, 1
      %s237 = scalar_select %p236, %s22, 1
      %p238 = scmp.lt.s32.totalorder %s235, 7
      %s239 = scalar_select %p238, %s235, 7
      %p240 = scmp.lt.s32.totalorder %s24, 0
      %s241 = scalar_select %p240, %s24, 0
      %s242 = sadd.s32 %s241, %s239
      %s243 = smul.addr %s237, 8
      %s244 = sadd.s32 %s242, %s243
      %s245 = smul.addr %s244, 4
      %s246 = scalar_lea.vmem %s0, %s245
      %p247 = pneg %p61
      %p248 = pneg %p58
      %p249 = pneg %p82
      %p250 = pneg %p79
      %p251 = pneg %p103
      %p252 = pneg %p100
      %p253 = pneg %p131
      %p254 = pneg %p128
      %s255 = smul.u32 8, %s23
      %p256 = scmp.lt.s32.totalorder %s22, 1
      %s257 = scalar_select %p256, %s22, 1
      %p258 = scmp.lt.s32.totalorder %s255, 7
      %s259 = scalar_select %p258, %s255, 7
      %s260 = smul.addr %s257, 8
      %s261 = sadd.s32 %s259, %s260
      %s262 = smul.addr %s261, 8
      %s263 = scalar_lea.vmem %s3, %s262
      %p264 = pneg %p159
      %p265 = pneg %p156
      %p266 = scmp.lt.s32.totalorder %s22, 1
      %s267 = scalar_select %p266, %s22, 1
      %p268 = scmp.lt.s32.totalorder %s23, 0
      %s269 = scalar_select %p268, %s23, 0
      %s270 = sadd.s32 %s269, %s267
      %s271 = scalar_lea.vmem %s4, %s270
      %p272 = pneg %p187
      %p273 = pneg %p184
      %p274 = scmp.lt.s32.totalorder %s22, 1
      %s275 = scalar_select %p274, %s22, 1
      %p276 = scmp.lt.s32.totalorder %s23, 0
      %s277 = scalar_select %p276, %s23, 0
      %s278 = sadd.s32 %s277, %s275
      %s279 = scalar_lea.vmem %s5, %s278
      %s280 = smul.u32 8, %s23
      %p281 = scmp.lt.s32.totalorder %s22, 1
      %s282 = scalar_select %p281, %s22, 1
      %p283 = scmp.lt.s32.totalorder %s280, 7
      %s284 = scalar_select %p283, %s280, 7
      %p285 = scmp.lt.s32.totalorder %s24, 0
      %s286 = scalar_select %p285, %s24, 0
      %s287 = sadd.s32 %s286, %s284
      %s288 = smul.addr %s282, 8
      %s289 = sadd.s32 %s287, %s288
      %s290 = smul.addr %s289, 4
      %s291 = scalar_lea.vmem %s0, %s290
      %s292 = smul.u32 8, %s23
      %s293 = smul.u32 8, %s23
      %p294 = scmp.lt.s32.totalorder %s22, 1
      %s295 = scalar_select %p294, %s22, 1
      %p296 = scmp.lt.s32.totalorder %s293, 7
      %s297 = scalar_select %p296, %s293, 7
      %s298 = smul.addr %s295, 8
      %s299 = sadd.s32 %s297, %s298
      %s300 = smul.addr %s299, 8
      %s301 = scalar_lea.vmem %s3, %s300
      %s302 = smul.u32 8, %s23
      %p303 = scmp.lt.s32.totalorder %s22, 1
      %s304 = scalar_select %p303, %s22, 1
      %p305 = scmp.lt.s32.totalorder %s23, 0
      %s306 = scalar_select %p305, %s23, 0
      %s307 = sadd.s32 %s306, %s304
      %s308 = scalar_lea.vmem %s4, %s307
      %p309 = scmp.lt.s32.totalorder %s22, 1
      %s310 = scalar_select %p309, %s22, 1
      %p311 = scmp.lt.s32.totalorder %s23, 0
      %s312 = scalar_select %p311, %s23, 0
      %s313 = sadd.s32 %s312, %s310
      %s314 = scalar_lea.vmem %s5, %s313
      %p316 = scmp.eq.s32.totalorder %s24, 0
      // Predicated region
      $region33: #{rcb_block_forward.2} parent=31 // pred_check
        %p317 = pneg %p316
      $region34: #{rcb_block_forward.2} parent=31 // pred_check_branch
        %319 = sbr.rel (%p317) target = $region36
      $region35: #{rcb_block_forward.2} parent=31 // pred_region
        %v320 = vld [vmem:[%s2] sm:$0x1]
        %v322 = vlaneseq
        %v323 = vshrl.u32 %v322, 7
        %v324 = vsub.s32 0, %v323
        %v325 = vrot.slane %v320, %v324
        %327 = vst [vmem:[%s301] sm:$0xff] %v325
        %328 = vst [vmem:[%s301 + $0x8] sm:$0xff] %v325
        %329 = vst [vmem:[%s301 + $0x10] sm:$0xff] %v325
        %330 = vst [vmem:[%s301 + $0x18] sm:$0xff] %v325
        %331 = vst [vmem:[%s301 + $0x20] sm:$0xff] %v325
        %332 = vst [vmem:[%s301 + $0x28] sm:$0xff] %v325
        %333 = vst [vmem:[%s301 + $0x30] sm:$0xff] %v325
        %334 = vst [vmem:[%s301 + $0x38] sm:$0xff] %v325
      $region36: #{rcb_block_forward.2} parent=31 // pred_fallthru
        _
      %s335 = smul.u32 %s24, 128
      %v336 = vld [vmem:[%s301] sm:$0xff]
      %v337 = vld [vmem:[%s301 + $0x8] sm:$0xff]
      %v338 = vld [vmem:[%s301 + $0x10] sm:$0xff]
      %v339 = vld [vmem:[%s301 + $0x18] sm:$0xff]
      %v340 = vld [vmem:[%s301 + $0x20] sm:$0xff]
      %v341 = vld [vmem:[%s301 + $0x28] sm:$0xff]
      %v342 = vld [vmem:[%s301 + $0x30] sm:$0xff]
      %v343 = vld [vmem:[%s301 + $0x38] sm:$0xff]
      %v344 = vld [vmem:[%s291] sm:$0xf]
      %v345 = vld [vmem:[%s291 + $0x4] sm:$0xf]
      %v346 = vld [vmem:[%s291 + $0x8] sm:$0xf]
      %v347 = vld [vmem:[%s291 + $0xc] sm:$0xf]
      %v348 = vld [vmem:[%s291 + $0x10] sm:$0xf]
      %v349 = vld [vmem:[%s291 + $0x14] sm:$0xf]
      %v350 = vld [vmem:[%s291 + $0x18] sm:$0xf]
      %v351 = vld [vmem:[%s291 + $0x1c] sm:$0xf]
      %s352 = sshra.s32 %s335, 3
      %s353 = sand.u32 %s335, 7
      %s354 = smul.addr %s352, 4
      %s355 = scalar_lea.vmem %s1, %s354
      %v356 = vld [vmem:[%s355] sm:$0xf]
      %v357 = vld [vmem:[%s355 + $0x4] sm:$0xf]
      %v358 = vld [vmem:[%s355 + $0x8] sm:$0xf]
      %v359 = vld [vmem:[%s355 + $0xc] sm:$0xf]
      %v360 = vld [vmem:[%s355 + $0x10] sm:$0xf]
      %v361 = vld [vmem:[%s355 + $0x14] sm:$0xf]
      %v362 = vld [vmem:[%s355 + $0x18] sm:$0xf]
      %v363 = vld [vmem:[%s355 + $0x1c] sm:$0xf]
      %v364 = vld [vmem:[%s355 + $0x20] sm:$0xf]
      %v365 = vld [vmem:[%s355 + $0x24] sm:$0xf]
      %v366 = vld [vmem:[%s355 + $0x28] sm:$0xf]
      %v367 = vld [vmem:[%s355 + $0x2c] sm:$0xf]
      %v368 = vld [vmem:[%s355 + $0x30] sm:$0xf]
      %v369 = vld [vmem:[%s355 + $0x34] sm:$0xf]
      %v370 = vld [vmem:[%s355 + $0x38] sm:$0xf]
      %v371 = vld [vmem:[%s355 + $0x3c] sm:$0xf]
      %v380 = vunpack.c.l.b16 %v344
      %v381 = vunpack.c.l.b16 %v345
      %v382 = vunpack.c.l.b16 %v346
      %v383 = vunpack.c.l.b16 %v347
      %v384 = vunpack.c.l.b16 %v348
      %v385 = vunpack.c.l.b16 %v349
      %v386 = vunpack.c.l.b16 %v350
      %v387 = vunpack.c.l.b16 %v351
      %v388 = vpack.c.b16 %v381, %v380
      %v389 = vpack.c.b16 %v383, %v382
      %v390 = vpack.c.b16 %v385, %v384
      %v391 = vpack.c.b16 %v387, %v386
      %v412 = vunpack.c.l.b16 %v356
      %v413 = vunpack.c.l.b16 %v357
      %v414 = vunpack.c.l.b16 %v358
      %v415 = vunpack.c.l.b16 %v359
      %v416 = vunpack.c.l.b16 %v360
      %v417 = vunpack.c.l.b16 %v361
      %v418 = vunpack.c.l.b16 %v362
      %v419 = vunpack.c.l.b16 %v363
      %v420 = vunpack.c.l.b16 %v364
      %v421 = vunpack.c.l.b16 %v365
      %v422 = vunpack.c.l.b16 %v366
      %v423 = vunpack.c.l.b16 %v367
      %v424 = vunpack.c.l.b16 %v368
      %v425 = vunpack.c.l.b16 %v369
      %v426 = vunpack.c.l.b16 %v370
      %v427 = vunpack.c.l.b16 %v371
      %v428 = vpack.c.b16 %v413, %v412
      %v429 = vpack.c.b16 %v415, %v414
      %v430 = vpack.c.b16 %v417, %v416
      %v431 = vpack.c.b16 %v419, %v418
      %v432 = vpack.c.b16 %v421, %v420
      %v433 = vpack.c.b16 %v423, %v422
      %v434 = vpack.c.b16 %v425, %v424
      %v435 = vpack.c.b16 %v427, %v426
      %444 = vmatprep.subr.bf16.mxu0 0
      %445 = vmatpush1.bf16.msra.mxu0 %v428
      %446 = vmatprep.subr.bf16.mxu0 0
      %447 = vmatpush1.bf16.msra.mxu0 %v429
      %448 = vmatprep.subr.bf16.mxu0 0
      %449 = vmatpush1.bf16.msra.mxu0 %v430
      %450 = vmatprep.subr.bf16.mxu0 0
      %451 = vmatpush1.bf16.msra.mxu0 %v431
      %452 = vmatprep.subr.bf16.mxu0 0
      %453 = vmatpush1.bf16.msra.mxu0 %v432
      %454 = vmatprep.subr.bf16.mxu0 0
      %455 = vmatpush1.bf16.msra.mxu0 %v433
      %456 = vmatprep.subr.bf16.mxu0 0
      %457 = vmatpush1.bf16.msra.mxu0 %v434
      %458 = vmatprep.subr.bf16.mxu0 0
      %459 = vmatpush1.bf16.msra.mxu0 %v435
      %460 = vmatprep.subr.bf16.mxu0 0
      %461 = vmatpush1.bf16.msra.mxu0 0
      %462 = vmatprep.subr.bf16.mxu0 0
      %463 = vmatpush1.bf16.msra.mxu0 0
      %464 = vmatprep.subr.bf16.mxu0 0
      %465 = vmatpush1.bf16.msra.mxu0 0
      %466 = vmatprep.subr.bf16.mxu0 0
      %467 = vmatpush1.bf16.msra.mxu0 0
      %468 = vmatprep.subr.bf16.mxu0 0
      %469 = vmatpush1.bf16.msra.mxu0 0
      %470 = vmatprep.subr.bf16.mxu0 0
      %471 = vmatpush1.bf16.msra.mxu0 0
      %472 = vmatprep.subr.bf16.mxu0 0
      %473 = vmatpush1.bf16.msra.mxu0 0
      %474 = vmatprep.subr.bf16.mxu0 0
      %475 = vmatpush1.bf16.msra.mxu0 0
      %476 = vmatprep.mubr.bf16.mxu0 0
      %477 = vmatmul.mubr.bf16.gmra.mrb[0].mxu0 %v388
      %v478 = vpop.f32.mrb[0].mxu0
      %v479 = vadd.f32 0.0, %v478
      %v480 = vpop.f32.mrb[0].mxu0
      %v481 = vpop.f32.mrb[0].mxu0
      %v482 = vadd.f32 0.0, %v481
      %v483 = vpop.f32.mrb[0].mxu0
      %484 = vmatprep.mubr.bf16.mxu0 0
      %485 = vmatmul.mubr.bf16.gmra.mrb[0].mxu0 %v389
      %v486 = vpop.f32.mrb[0].mxu0
      %v487 = vadd.f32 0.0, %v486
      %v488 = vpop.f32.mrb[0].mxu0
      %v489 = vpop.f32.mrb[0].mxu0
      %v490 = vadd.f32 0.0, %v489
      %v491 = vpop.f32.mrb[0].mxu0
      %492 = vmatprep.mubr.bf16.mxu0 0
      %493 = vmatmul.mubr.bf16.gmra.mrb[0].mxu0 %v390
      %v494 = vpop.f32.mrb[0].mxu0
      %v495 = vadd.f32 0.0, %v494
      %v496 = vpop.f32.mrb[0].mxu0
      %v497 = vpop.f32.mrb[0].mxu0
      %v498 = vadd.f32 0.0, %v497
      %v499 = vpop.f32.mrb[0].mxu0
      %500 = vmatprep.mubr.bf16.mxu0 0
      %501 = vmatmul.mubr.bf16.gmra.mrb[0].mxu0 %v391
      %v502 = vpop.f32.mrb[0].mxu0
      %v503 = vadd.f32 0.0, %v502
      %v504 = vpop.f32.mrb[0].mxu0
      %v505 = vpop.f32.mrb[0].mxu0
      %v506 = vadd.f32 0.0, %v505
      %v507 = vpop.f32.mrb[0].mxu0
      %508 = vdwg.mxu0
      %v509 = vadd.f32 %v336, %v479
      %v510 = vadd.f32 %v337, %v482
      %v511 = vadd.f32 %v338, %v487
      %v512 = vadd.f32 %v339, %v490
      %v513 = vadd.f32 %v340, %v495
      %v514 = vadd.f32 %v341, %v498
      %v515 = vadd.f32 %v342, %v503
      %v516 = vadd.f32 %v343, %v506
      %517 = vst [vmem:[%s301] sm:$0xff] %v509
      %518 = vst [vmem:[%s301 + $0x8] sm:$0xff] %v510
      %519 = vst [vmem:[%s301 + $0x10] sm:$0xff] %v511
      %520 = vst [vmem:[%s301 + $0x18] sm:$0xff] %v512
      %521 = vst [vmem:[%s301 + $0x20] sm:$0xff] %v513
      %522 = vst [vmem:[%s301 + $0x28] sm:$0xff] %v514
      %523 = vst [vmem:[%s301 + $0x30] sm:$0xff] %v515
      %524 = vst [vmem:[%s301 + $0x38] sm:$0xff] %v516
      // Predicated region
      $region37: #{rcb_block_forward.2} parent=31 // pred_check
        %p525 = pneg %p316
      $region38: #{rcb_block_forward.2} parent=31 // pred_check_branch
        %527 = sbr.rel (%p525) target = $region40
      $region39: #{rcb_block_forward.2} parent=31 // pred_region
        %v528 = vld [vmem:[%s301] sm:$0xff]
        %v529 = vld [vmem:[%s301 + $0x8] sm:$0xff]
        %v530 = vld [vmem:[%s301 + $0x10] sm:$0xff]
        %v531 = vld [vmem:[%s301 + $0x18] sm:$0xff]
        %v532 = vld [vmem:[%s301 + $0x20] sm:$0xff]
        %v533 = vld [vmem:[%s301 + $0x28] sm:$0xff]
        %v534 = vld [vmem:[%s301 + $0x30] sm:$0xff]
        %v535 = vld [vmem:[%s301 + $0x38] sm:$0xff]
        %v536 = vadd.f32 %v528, %v529
        %v537 = vadd.f32 %v536, %v530
        %v538 = vadd.f32 %v537, %v531
        %v539 = vadd.f32 %v538, %v532
        %v540 = vadd.f32 %v539, %v533
        %v541 = vadd.f32 %v540, %v534
        %v542 = vadd.f32 %v541, %v535
        %v543 = vrot.slane %v542, 4
        %v544 = vadd.f32 %v542, %v543
        %v545 = vrot.slane %v544, 2
        %v546 = vadd.f32 %v544, %v545
        %v547 = vrot.slane %v546, 1
        %v548 = vadd.f32 %v546, %v547
        %549 = vst [vmem:[%s308] sm:$0x1] %v548
        %v550 = vmul.f32 %v528, %v528
        %v551 = vmul.f32 %v529, %v529
        %v552 = vmul.f32 %v530, %v530
        %v553 = vmul.f32 %v531, %v531
        %v554 = vmul.f32 %v532, %v532
        %v555 = vmul.f32 %v533, %v533
        %v556 = vmul.f32 %v534, %v534
        %v557 = vmul.f32 %v535, %v535
        %v558 = vadd.f32 %v550, %v551
        %v559 = vadd.f32 %v558, %v552
        %v560 = vadd.f32 %v559, %v553
        %v561 = vadd.f32 %v560, %v554
        %v562 = vadd.f32 %v561, %v555
        %v563 = vadd.f32 %v562, %v556
        %v564 = vadd.f32 %v563, %v557
        %v565 = vrot.slane %v564, 4
        %v566 = vadd.f32 %v564, %v565
        %v567 = vrot.slane %v566, 2
        %v568 = vadd.f32 %v566, %v567
        %v569 = vrot.slane %v568, 1
        %v570 = vadd.f32 %v568, %v569
        %571 = vst [vmem:[%s314] sm:$0x1] %v570
      $region40: #{rcb_block_forward.2} parent=31 // pred_fallthru
        _
      %s572 = smul.u32 8, %s23
      %p573 = scmp.lt.s32.totalorder %s22, 1
      %s574 = scalar_select %p573, %s22, 1
      %p575 = scmp.lt.s32.totalorder %s572, 7
      %s576 = scalar_select %p575, %s572, 7
      %s577 = smul.addr %s574, 8
      %s578 = sadd.s32 %s576, %s577
      %s579 = smul.addr %s578, 8
      %s580 = scalar_lea.vmem %s3, %s579
      %p581 = scmp.lt.s32.totalorder %s22, 1
      %s582 = scalar_select %p581, %s22, 1
      %p583 = scmp.lt.s32.totalorder %s23, 0
      %s584 = scalar_select %p583, %s23, 0
      %s585 = sadd.s32 %s584, %s582
      %s586 = scalar_lea.vmem %s4, %s585
      %p587 = scmp.lt.s32.totalorder %s22, 1
      %s588 = scalar_select %p587, %s22, 1
      %p589 = scmp.lt.s32.totalorder %s23, 0
      %s590 = scalar_select %p589, %s23, 0
      %s591 = sadd.s32 %s590, %s588
      %s592 = scalar_lea.vmem %s5, %s591
      // Predicated region
      $region41: #{rcb_block_forward.2} parent=31 // pred_check
        %p593 = pneg %p128
      $region42: #{rcb_block_forward.2} parent=31 // pred_check_branch
        %595 = sbr.rel (%p593) target = $region44
      $region43: #{rcb_block_forward.2} parent=31 // pred_region
        %s596 = smul.u32 8, %s23
      $region44: #{rcb_block_forward.2} parent=31 // pred_fallthru
        _
      // Predicated region
      $region45: #{rcb_block_forward.2} parent=31 // pred_check
        %p597 = pneg %p156
      $region46: #{rcb_block_forward.2} parent=31 // pred_check_branch
        %599 = sbr.rel (%p597) target = $region48
      $region47: #{rcb_block_forward.2} parent=31 // pred_region
        _
      $region48: #{rcb_block_forward.2} parent=31 // pred_fallthru
        _
      // Predicated region
      $region49: #{rcb_block_forward.2} parent=31 // pred_check
        %p600 = pneg %p184
      $region50: #{rcb_block_forward.2} parent=31 // pred_check_branch
        %602 = sbr.rel (%p600) target = $region52
      $region51: #{rcb_block_forward.2} parent=31 // pred_region
        _
      $region52: #{rcb_block_forward.2} parent=31 // pred_fallthru
        _
    $region32: #{rcb_block_forward.2} parent=5 // pred_fallthru
      _
    %p603 = scmp.le.s32.totalorder 2, %s12
    // Predicated region
    $region53: #{rcb_block_forward.2} parent=5 // pred_check
      %p604 = pneg %p603
    $region54: #{rcb_block_forward.2} parent=5 // pred_check_branch
      %606 = sbr.rel (%p604) target = $region56
    $region55: #{rcb_block_forward.2} parent=5 // pred_region
      %s607 = ssub.s32 %s12, 2
      // Predicated region
      $region57: #{rcb_block_forward.2} parent=55 // pred_check
        %p608 = pneg %p134
      $region58: #{rcb_block_forward.2} parent=55 // pred_check_branch
        %610 = sbr.rel (%p608) target = $region60
      $region59: #{rcb_block_forward.2} parent=55 // pred_region
        %s611 = smul.u32 8, %s26
        %p612 = scmp.lt.s32.totalorder %s25, 1
        %s613 = scalar_select %p612, %s25, 1
        %p614 = scmp.lt.s32.totalorder %s611, 7
        %s615 = scalar_select %p614, %s611, 7
        %s616 = smul.addr %s613, 8
        %s617 = sadd.s32 %s615, %s616
        %s618 = smul.addr %s617, 8
        %s619 = scalar_lea.vmem %s3, %s618
      $region60: #{rcb_block_forward.2} parent=55 // pred_fallthru
        _
      // Predicated region
      $region61: #{rcb_block_forward.2} parent=55 // pred_check
        %p620 = pneg %p162
      $region62: #{rcb_block_forward.2} parent=55 // pred_check_branch
        %622 = sbr.rel (%p620) target = $region64
      $region63: #{rcb_block_forward.2} parent=55 // pred_region
        %p623 = scmp.lt.s32.totalorder %s25, 1
        %s624 = scalar_select %p623, %s25, 1
        %p625 = scmp.lt.s32.totalorder %s26, 0
        %s626 = scalar_select %p625, %s26, 0
        %s627 = sadd.s32 %s626, %s624
        %s628 = scalar_lea.vmem %s4, %s627
      $region64: #{rcb_block_forward.2} parent=55 // pred_fallthru
        _
      // Predicated region
      $region65: #{rcb_block_forward.2} parent=55 // pred_check
        %p629 = pneg %p190
      $region66: #{rcb_block_forward.2} parent=55 // pred_check_branch
        %631 = sbr.rel (%p629) target = $region68
      $region67: #{rcb_block_forward.2} parent=55 // pred_region
        %p632 = scmp.lt.s32.totalorder %s25, 1
        %s633 = scalar_select %p632, %s25, 1
        %p634 = scmp.lt.s32.totalorder %s26, 0
        %s635 = scalar_select %p634, %s26, 0
        %s636 = sadd.s32 %s635, %s633
        %s637 = scalar_lea.vmem %s5, %s636
      $region68: #{rcb_block_forward.2} parent=55 // pred_fallthru
        _
    $region56: #{rcb_block_forward.2} parent=5 // pred_fallthru
      _
  $region6: #{rcb_block_forward.2} parent=0 // loop_footer
    %s16 = sadd.s32 1, %s12
  $region7: #{rcb_block_forward.2} parent=0 // loop_footer_branch
    %11 = sbr.rel target = $region3
  $region8: #{rcb_block_forward.2} parent=0 // loop_exit
    _

</llo_original>
